<compile_context>
chip_gen: v7x
topology: tpu7x:2x2x1
jax: 0.10.0
libtpu: 0.0.40
codegen_flags: <defaults>
</compile_context>

<pallas_src>
import functools

import jax
import jax.numpy as jnp
from jax import lax
from jax.experimental import pallas as pl
from jax.experimental.pallas import tpu as pltpu


def _fused_kernel_h(x_ref, w_ref, b_ref, o_ref):
    # x_ref: (tm, d_in)   w_ref: (n*d_out, d_in)   b_ref: (1, n*d_out)
    # o_ref: (tm, n*d_out) -- the hstacked output tile, written lane-dense in one store.
    y = lax.dot_general(
        x_ref[...], w_ref[...],
        dimension_numbers=(((1,), (1,)), ((), ())),   # x @ W_all^T, no transpose copy
        preferred_element_type=jnp.float32)
    o_ref[...] = (y + b_ref[...]).astype(o_ref.dtype)


def _fused_kernel_v(x_ref, w_ref, b_ref, o_ref, *, n, d_out):
    # Same single fused matmul; o_ref: (n, tm, d_out). Each branch's slice of the fused
    # result is stored into its plane of the 3-D output (reshaped to vstack for free
    # in the wrapper). n is small and static -> the loop unrolls at trace time.
    y = lax.dot_general(
        x_ref[...], w_ref[...],
        dimension_numbers=(((1,), (1,)), ((), ())),
        preferred_element_type=jnp.float32)
    y = (y + b_ref[...]).astype(o_ref.dtype)
    for b in range(n):
        o_ref[b] = y[:, b * d_out:(b + 1) * d_out]


def _pick_batch_tile(n_rows):
    # Largest tile (<=512, multiple of 8) that evenly divides the batch; measured data
    # shows ~512-row tiles hit ~85% of HBM roofline while keeping VMEM small.
    for tm in (512, 256, 128, 64, 32, 16, 8):
        if n_rows % tm == 0:
            return tm
    return n_rows  # block equals the full dim -> still satisfies the (8,128) rule


def _vmem_limit_bytes(tm, d_in, nd, itemsize):
    # double-buffered x / W_all / bias / output tiles + the f32 intermediate,
    # with 2x headroom, clamped well under v7x's 64 MiB physical VMEM.
    per_step = tm * d_in + nd * d_in + nd + tm * nd
    est = 2 * per_step * itemsize + tm * nd * 4
    return int(min(max(4 << 20, 2 * est), 48 << 20))


def split_linear(x, weights, biases, stack="h"):
    """Split(stack, Linear_0, ..., Linear_{n-1})(x) as a single fused Pallas kernel.

    x:       (N, d_in)
    weights: (n, d_out, d_in)   -- torch.nn.Linear convention (out, in)
    biases:  (n, d_out)
    """
    n, d_out, d_in = weights.shape
    N, D = x.shape
    assert D == d_in
    nd = n * d_out

    # Free, contiguous reshapes only (no HBM transpose of the weights).
    w_all = weights.reshape(nd, d_in)     # branch weights stacked along output rows
    b_all = biases.reshape(1, nd)

    tm = _pick_batch_tile(N)
    num_m = N // tm if N % tm == 0 else 1

    in_specs = [
        pl.BlockSpec((tm, d_in), lambda m: (m, 0)),   # batch tile of x
        pl.BlockSpec((nd, d_in), lambda m: (0, 0)),   # resident fused weights
        pl.BlockSpec((1, nd), lambda m: (0, 0)),      # resident fused bias
    ]

    if stack == "h":
        out_shape = jax.ShapeDtypeStruct((N, nd), x.dtype)
        out_spec = pl.BlockSpec((tm, nd), lambda m: (m, 0))
        kernel = _fused_kernel_h
        post = lambda o: o
    elif stack == "v":
        # 3-D output (n, N, d_out); contiguous reshape to (n*N, d_out) == torch.vstack.
        out_shape = jax.ShapeDtypeStruct((n, N, d_out), x.dtype)
        out_spec = pl.BlockSpec((n, tm, d_out), lambda m: (0, m, 0))
        kernel = functools.partial(_fused_kernel_v, n=n, d_out=d_out)
        post = lambda o: o.reshape(n * N, d_out)
    else:
        raise ValueError("stack must be 'h' or 'v'")

    out = pl.pallas_call(
        kernel,
        out_shape=out_shape,
        grid_spec=pltpu.PrefetchScalarGridSpec(
            num_scalar_prefetch=0,
            grid=(num_m,),
            in_specs=in_specs,
            out_specs=out_spec,
        ),
        compiler_params=pltpu.CompilerParams(
            dimension_semantics=("parallel",),   # batch-tile axis: shards across v7x TCs
            vmem_limit_bytes=_vmem_limit_bytes(tm, d_in, nd, x.dtype.itemsize),
        ),
    )(x, w_all, b_all)
    return post(out)


def _init_linear_params(key, n_branches, d_in, d_out):
    # Deterministic synthetic init mimicking nn.Linear's uniform(-1/sqrt(in), 1/sqrt(in)).
    kw, kb = jax.random.split(key)
    bound = 1.0 / jnp.sqrt(jnp.float32(d_in))
    w = jax.random.uniform(kw, (n_branches, d_out, d_in), jnp.float32, -bound, bound)
    b = jax.random.uniform(kb, (n_branches, d_out), jnp.float32, -bound, bound)
    return w, b


if __name__ == "__main__":
    key = jax.random.PRNGKey(0)
    kx, kp = jax.random.split(key)

    N, D, n_branches = 8, 128, 3   # batch=8, hidden=128, 3 nested Linear modules
    x = jax.random.normal(kx, (N, D), jnp.float32)
    weights, biases = _init_linear_params(kp, n_branches, D, D)

    # Split('h', Linear, Linear, Linear) and Split('v', ...)
    out_h = jax.block_until_ready(split_linear(x, weights, biases, stack="h"))
    out_v = jax.block_until_ready(split_linear(x, weights, biases, stack="v"))

    # Plain-JAX reference matching torch.hstack / torch.vstack semantics.
    branch_outs = [x @ weights[i].T + biases[i] for i in range(n_branches)]
    ref_h = jnp.concatenate(branch_outs, axis=1)
    ref_v = jnp.concatenate(branch_outs, axis=0)

    assert out_h.shape == (N, n_branches * D)
    assert out_v.shape == (n_branches * N, D)
    assert jnp.allclose(out_h, ref_h, atol=1e-5, rtol=1e-5)
    assert jnp.allclose(out_v, ref_v, atol=1e-5, rtol=1e-5)

    # Second small config that exercises the batch-tile grid (N=48 -> tm=16, 3 steps).
    N2 = 48
    x2 = jax.random.normal(jax.random.PRNGKey(1), (N2, D), jnp.float32)
    out_h2 = jax.block_until_ready(split_linear(x2, weights, biases, stack="h"))
    out_v2 = jax.block_until_ready(split_linear(x2, weights, biases, stack="v"))
    ref2 = [x2 @ weights[i].T + biases[i] for i in range(n_branches)]
    assert jnp.allclose(out_h2, jnp.concatenate(ref2, axis=1), atol=1e-5, rtol=1e-5)
    assert jnp.allclose(out_v2, jnp.concatenate(ref2, axis=0), atol=1e-5, rtol=1e-5)

    print("KERNEL_OK")
</pallas_src>

<mosaic_0001>
module attributes {stable_mosaic.version = 11 : i64} {
  func.func @_fused_kernel_h(%arg0: i32, %arg1: memref<8x128xf32, #tpu.memory_space<vmem>>, %arg2: memref<384x128xf32, #tpu.memory_space<vmem>>, %arg3: memref<1x384xf32, #tpu.memory_space<vmem>>, %arg4: memref<8x384xf32, #tpu.memory_space<vmem>>) attributes {dimension_semantics = [#tpu.dimension_semantics<parallel>], iteration_bounds = array<i64: 1>, scalar_prefetch = 0 : i64, scratch_operands = 0 : i64, tpu.core_type = #tpu.core_type<tc>, window_params = [{transform_indices = @transform_0, window_bounds = array<i64: 8, 128>}, {pipeline_mode = #tpu.pipeline_mode<synchronous>, transform_indices = @transform_1, window_bounds = array<i64: 384, 128>}, {pipeline_mode = #tpu.pipeline_mode<synchronous>, transform_indices = @transform_2, window_bounds = array<i64: 1, 384>}, {transform_indices = @transform_3, window_bounds = array<i64: 8, 384>}]} {
    %c0 = arith.constant 0 : index
    %c0_0 = arith.constant 0 : index
    %0 = vector.load %arg1[%c0, %c0_0] : memref<8x128xf32, #tpu.memory_space<vmem>>, vector<8x128xf32>
    %c0_1 = arith.constant 0 : index
    %c0_2 = arith.constant 0 : index
    %1 = vector.load %arg2[%c0_1, %c0_2] : memref<384x128xf32, #tpu.memory_space<vmem>>, vector<384x128xf32>
    %cst = arith.constant dense<0.000000e+00> : vector<8x384xf32>
    %2 = tpu.matmul %0, %1, %cst {dimension_numbers = #tpu.dot_dimension_numbers<[1], [1], [0], [0], [0, 0, 1, 0], [], []>} : vector<8x128xf32>, vector<384x128xf32>, vector<8x384xf32> -> vector<8x384xf32>
    %c0_3 = arith.constant 0 : index
    %c0_4 = arith.constant 0 : index
    %3 = vector.load %arg3[%c0_3, %c0_4] : memref<1x384xf32, #tpu.memory_space<vmem>>, vector<1x384xf32>
    %4 = vector.broadcast %3 : vector<1x384xf32> to vector<8x384xf32>
    %5 = arith.addf %2, %4 : vector<8x384xf32>
    %c0_5 = arith.constant 0 : index
    %c0_6 = arith.constant 0 : index
    %6 = vector.load %arg4[%c0_5, %c0_6] : memref<8x384xf32, #tpu.memory_space<vmem>>, vector<8x384xf32>
    tpu.vector_store %arg4[%c0_5, %c0_6], %5 {strides = array<i32>} : memref<8x384xf32, #tpu.memory_space<vmem>>, vector<8x384xf32>,
    return
  }
  func.func @transform_0(%arg0: i32) -> (i32, i32) {
    %c0_i32 = arith.constant 0 : i32
    %c0_i32_0 = arith.constant 0 : i32
    return %arg0, %c0_i32 : i32, i32
  }
  func.func @transform_1(%arg0: i32) -> (i32, i32) {
    %c0_i32 = arith.constant 0 : i32
    %c0_i32_0 = arith.constant 0 : i32
    %c0_i32_1 = arith.constant 0 : i32
    return %c0_i32, %c0_i32_0 : i32, i32
  }
  func.func @transform_2(%arg0: i32) -> (i32, i32) {
    %c0_i32 = arith.constant 0 : i32
    %c0_i32_0 = arith.constant 0 : i32
    %c0_i32_1 = arith.constant 0 : i32
    return %c0_i32, %c0_i32_0 : i32, i32
  }
  func.func @transform_3(%arg0: i32) -> (i32, i32) {
    %c0_i32 = arith.constant 0 : i32
    %c0_i32_0 = arith.constant 0 : i32
    return %arg0, %c0_i32 : i32, i32
  }
}

</mosaic_0001>

<llo_original>
// kernel: tpu_custom_call.1
$region0: #{tpu_custom_call.1}
  #allocation0 [shape = 'u32[]', space=smem, size = 0x4, offset = 0x4, fixed_abs, tag = 'smem constant byte address 0x4 - core index']
  #allocation1 [shape = 'u32[144,128]{1,0:T(1,128)}', space=vmem, size = 0x12000, scoped, tag = 'internal scratch']
  %s0 = inlined_call_operand.hbm [shape: f32[8,128], index: 0, kind: input, shape index: {}]
  %s1 = inlined_call_operand.hbm [shape: f32[384,128], index: 1, kind: input, shape index: {}]
  %s2 = inlined_call_operand.vmem [shape: f32[1,384], index: 2, kind: input, shape index: {}]
  %s3 = inlined_call_operand.hbm [shape: f32[8,384], index: 3, kind: output, shape index: {}]
  %s4 = sld [smem:[#allocation0]]
  $region30: #{tpu_custom_call.1} parent=0
    _
  %s6 = ssub.s32 1, %s4
  %s7 = scalar_select 0, %s6, %s4
  $region1: #{tpu_custom_call.1} parent=0
    #allocation2 [shape = 'u8[4096]{0}', space=vmem, size = 0x1000, scoped, tag = 'input window, operand 0, single buffered']
    #allocation3 [shape = 's32[1]{0}', space=sflag, size = 0x4, scoped, tag = 'scoped memory for tpu_custom_call.1']
    #allocation4 [shape = 's32[1]{0}', space=sflag, size = 0x4, scoped, tag = 'scoped memory for tpu_custom_call.1']
    #allocation5 [shape = 'u8[196608]{0}', space=vmem, size = 0x30000, scoped, tag = 'input window, operand 1, single buffered']
    #allocation6 [shape = 's32[1]{0}', space=sflag, size = 0x4, scoped, tag = 'scoped memory for tpu_custom_call.1']
    #allocation7 [shape = 'u8[12288]{0}', space=vmem, size = 0x3000, scoped, tag = 'output window, operand 0, single buffered']
    %8 = vsyncpa [#allocation3], 0
    %9 = vsyncpa [#allocation6], 0
    %10 = vsyncpa [#allocation4], 0
    // Predicated region
    $region2: #{tpu_custom_call.1} parent=1 // pred_check
      _
    $region3: #{tpu_custom_call.1} parent=1 // pred_check_branch
      %12 = sbr.rel (0) target = $region5
    $region4: #{tpu_custom_call.1} parent=1 // pred_region
      %s14 = ssub.s32 128, 128
      %15 = vsyncadd [#allocation3], %s14
      %s17 = sshll.u32 [#allocation2], 4
      %s18 = int_to_ptr.vmem [resolvable:$true] %s17
      %20 = dma.hbm_to_vmem [thread:$0]  %s0, 128, %s18, [#allocation3]
    $region5: #{tpu_custom_call.1} parent=1 // pred_fallthru
      _
    // Predicated region
    $region6: #{tpu_custom_call.1} parent=1 // pred_check
      _
    $region7: #{tpu_custom_call.1} parent=1 // pred_check_branch
      %22 = sbr.rel (0) target = $region9
    $region8: #{tpu_custom_call.1} parent=1 // pred_region
      %s24 = ssub.s32 6144, 6144
      %25 = vsyncadd [#allocation6], %s24
      %s26 = sshll.u32 [#allocation5], 4
      %s27 = int_to_ptr.vmem [resolvable:$true] %s26
      %32 = dma.hbm_to_vmem [thread:$0]  %s1, 6144, %s27, [#allocation6], 128, 128, 8
    $region9: #{tpu_custom_call.1} parent=1 // pred_fallthru
      _
    // Predicated region
    $region10: #{tpu_custom_call.1} parent=1 // pred_check
      _
    $region11: #{tpu_custom_call.1} parent=1 // pred_check_branch
      %34 = sbr.rel (0) target = $region13
    $region12: #{tpu_custom_call.1} parent=1 // pred_region
      _
    $region13: #{tpu_custom_call.1} parent=1 // pred_fallthru
      _
    // Predicated region
    $region14: #{tpu_custom_call.1} parent=1 // pred_check
      _
    $region15: #{tpu_custom_call.1} parent=1 // pred_check_branch
      %36 = sbr.rel (0) target = $region17
    $region16: #{tpu_custom_call.1} parent=1 // pred_region
      %37 = dma.done [#allocation3], 128
    $region17: #{tpu_custom_call.1} parent=1 // pred_fallthru
      _
    // Predicated region
    $region18: #{tpu_custom_call.1} parent=1 // pred_check
      _
    $region19: #{tpu_custom_call.1} parent=1 // pred_check_branch
      %39 = sbr.rel (0) target = $region21
    $region20: #{tpu_custom_call.1} parent=1 // pred_region
      %40 = dma.done [#allocation6], 6144
    $region21: #{tpu_custom_call.1} parent=1 // pred_fallthru
      _
    %v41 = vld [vmem:[#allocation2] sm:$0xff]
    %v42 = vld [vmem:[#allocation5] sm:$0xff]
    %v43 = vld [vmem:[#allocation5 + $0x8] sm:$0xff]
    %v44 = vld [vmem:[#allocation5 + $0x10] sm:$0xff]
    %v45 = vld [vmem:[#allocation5 + $0x18] sm:$0xff]
    %v46 = vld [vmem:[#allocation5 + $0x20] sm:$0xff]
    %v47 = vld [vmem:[#allocation5 + $0x28] sm:$0xff]
    %v48 = vld [vmem:[#allocation5 + $0x30] sm:$0xff]
    %v49 = vld [vmem:[#allocation5 + $0x38] sm:$0xff]
    %v50 = vld [vmem:[#allocation5 + $0x40] sm:$0xff]
    %v51 = vld [vmem:[#allocation5 + $0x48] sm:$0xff]
    %v52 = vld [vmem:[#allocation5 + $0x50] sm:$0xff]
    %v53 = vld [vmem:[#allocation5 + $0x58] sm:$0xff]
    %v54 = vld [vmem:[#allocation5 + $0x60] sm:$0xff]
    %v55 = vld [vmem:[#allocation5 + $0x68] sm:$0xff]
    %v56 = vld [vmem:[#allocation5 + $0x70] sm:$0xff]
    %v57 = vld [vmem:[#allocation5 + $0x78] sm:$0xff]
    %v58 = vld [vmem:[#allocation5 + $0x80] sm:$0xff]
    %v59 = vld [vmem:[#allocation5 + $0x88] sm:$0xff]
    %v60 = vld [vmem:[#allocation5 + $0x90] sm:$0xff]
    %v61 = vld [vmem:[#allocation5 + $0x98] sm:$0xff]
    %v62 = vld [vmem:[#allocation5 + $0xa0] sm:$0xff]
    %v63 = vld [vmem:[#allocation5 + $0xa8] sm:$0xff]
    %v64 = vld [vmem:[#allocation5 + $0xb0] sm:$0xff]
    %v65 = vld [vmem:[#allocation5 + $0xb8] sm:$0xff]
    %v66 = vld [vmem:[#allocation5 + $0xc0] sm:$0xff]
    %v67 = vld [vmem:[#allocation5 + $0xc8] sm:$0xff]
    %v68 = vld [vmem:[#allocation5 + $0xd0] sm:$0xff]
    %v69 = vld [vmem:[#allocation5 + $0xd8] sm:$0xff]
    %v70 = vld [vmem:[#allocation5 + $0xe0] sm:$0xff]
    %v71 = vld [vmem:[#allocation5 + $0xe8] sm:$0xff]
    %v72 = vld [vmem:[#allocation5 + $0xf0] sm:$0xff]
    %v73 = vld [vmem:[#allocation5 + $0xf8] sm:$0xff]
    %v74 = vld [vmem:[#allocation5 + $0x100] sm:$0xff]
    %v75 = vld [vmem:[#allocation5 + $0x108] sm:$0xff]
    %v76 = vld [vmem:[#allocation5 + $0x110] sm:$0xff]
    %v77 = vld [vmem:[#allocation5 + $0x118] sm:$0xff]
    %v78 = vld [vmem:[#allocation5 + $0x120] sm:$0xff]
    %v79 = vld [vmem:[#allocation5 + $0x128] sm:$0xff]
    %v80 = vld [vmem:[#allocation5 + $0x130] sm:$0xff]
    %v81 = vld [vmem:[#allocation5 + $0x138] sm:$0xff]
    %v82 = vld [vmem:[#allocation5 + $0x140] sm:$0xff]
    %v83 = vld [vmem:[#allocation5 + $0x148] sm:$0xff]
    %v84 = vld [vmem:[#allocation5 + $0x150] sm:$0xff]
    %v85 = vld [vmem:[#allocation5 + $0x158] sm:$0xff]
    %v86 = vld [vmem:[#allocation5 + $0x160] sm:$0xff]
    %v87 = vld [vmem:[#allocation5 + $0x168] sm:$0xff]
    %v88 = vld [vmem:[#allocation5 + $0x170] sm:$0xff]
    %v89 = vld [vmem:[#allocation5 + $0x178] sm:$0xff]
    %v90 = vld [vmem:[%s2] sm:$0x7]
    %v92 = vlaneseq
    %v93 = vshrl.u32 %v92, 7
    %v94 = vsub.s32 0, %v93
    %v95 = vrot.slane %v90, %v94
    %v96 = vlaneseq
    %v97 = vshrl.u32 %v96, 7
    %v98 = vsub.s32 1, %v97
    %v99 = vrot.slane %v90, %v98
    %v100 = vlaneseq
    %v101 = vshrl.u32 %v100, 7
    %v102 = vsub.s32 2, %v101
    %v103 = vrot.slane %v90, %v102
    %107 = vmatprep.subr.mxu0 0.0
    %108 = vmatpush1.xpose.msra.mxu0 %v42
    %109 = vmatprep.subr.mxu0 0.0
    %110 = vmatpush1.xpose.msra.mxu0 %v43
    %111 = vmatprep.subr.mxu0 0.0
    %112 = vmatpush1.xpose.msra.mxu0 %v44
    %113 = vmatprep.subr.mxu0 0.0
    %114 = vmatpush1.xpose.msra.mxu0 %v45
    %115 = vmatprep.subr.mxu0 0.0
    %116 = vmatpush1.xpose.msra.mxu0 %v46
    %117 = vmatprep.subr.mxu0 0.0
    %118 = vmatpush1.xpose.msra.mxu0 %v47
    %119 = vmatprep.subr.mxu0 0.0
    %120 = vmatpush1.xpose.msra.mxu0 %v48
    %121 = vmatprep.subr.mxu0 0.0
    %122 = vmatpush1.xpose.msra.mxu0 %v49
    %123 = vmatprep.subr.mxu0 0.0
    %124 = vmatpush1.xpose.msra.mxu0 %v50
    %125 = vmatprep.subr.mxu0 0.0
    %126 = vmatpush1.xpose.msra.mxu0 %v51
    %127 = vmatprep.subr.mxu0 0.0
    %128 = vmatpush1.xpose.msra.mxu0 %v52
    %129 = vmatprep.subr.mxu0 0.0
    %130 = vmatpush1.xpose.msra.mxu0 %v53
    %131 = vmatprep.subr.mxu0 0.0
    %132 = vmatpush1.xpose.msra.mxu0 %v54
    %133 = vmatprep.subr.mxu0 0.0
    %134 = vmatpush1.xpose.msra.mxu0 %v55
    %135 = vmatprep.subr.mxu0 0.0
    %136 = vmatpush1.xpose.msra.mxu0 %v56
    %137 = vmatprep.subr.mxu0 0.0
    %138 = vmatpush1.xpose.msra.mxu0 %v57
    %139 = vmatprep.subr.mxu0 0.0
    %140 = vmatpush1.xpose.msra.mxu0 %v58
    %141 = vmatprep.subr.mxu0 0.0
    %142 = vmatpush1.xpose.msra.mxu0 %v59
    %143 = vmatprep.subr.mxu0 0.0
    %144 = vmatpush1.xpose.msra.mxu0 %v60
    %145 = vmatprep.subr.mxu0 0.0
    %146 = vmatpush1.xpose.msra.mxu0 %v61
    %147 = vmatprep.subr.mxu0 0.0
    %148 = vmatpush1.xpose.msra.mxu0 %v62
    %149 = vmatprep.subr.mxu0 0.0
    %150 = vmatpush1.xpose.msra.mxu0 %v63
    %151 = vmatprep.subr.mxu0 0.0
    %152 = vmatpush1.xpose.msra.mxu0 %v64
    %153 = vmatprep.subr.mxu0 0.0
    %154 = vmatpush1.xpose.msra.mxu0 %v65
    %155 = vmatprep.subr.mxu0 0.0
    %156 = vmatpush1.xpose.msra.mxu0 %v66
    %157 = vmatprep.subr.mxu0 0.0
    %158 = vmatpush1.xpose.msra.mxu0 %v67
    %159 = vmatprep.subr.mxu0 0.0
    %160 = vmatpush1.xpose.msra.mxu0 %v68
    %161 = vmatprep.subr.mxu0 0.0
    %162 = vmatpush1.xpose.msra.mxu0 %v69
    %163 = vmatprep.subr.mxu0 0.0
    %164 = vmatpush1.xpose.msra.mxu0 %v70
    %165 = vmatprep.subr.mxu0 0.0
    %166 = vmatpush1.xpose.msra.mxu0 %v71
    %167 = vmatprep.subr.mxu0 0.0
    %168 = vmatpush1.xpose.msra.mxu0 %v72
    %169 = vmatprep.subr.mxu0 0.0
    %170 = vmatpush1.xpose.msra.mxu0 %v73
    %171 = vmatprep.mubr.f32.mxu0 0.0
    %172 = vmatmul.mubr.f32.gmra.mrb[0].mxu0 %v41
    %v173 = vpop.f32.mrb[0].mxu0
    %v174 = vadd.f32 %v95, %v173
    %v175 = vpop.f32.mrb[0].mxu0
    %v176 = vadd.f32 %v99, %v175
    %177 = vdwg.mxu0
    %178 = vmatprep.subr.mxu0 0.0
    %179 = vmatpush1.xpose.msra.mxu0 %v74
    %180 = vmatprep.subr.mxu0 0.0
    %181 = vmatpush1.xpose.msra.mxu0 %v75
    %182 = vmatprep.subr.mxu0 0.0
    %183 = vmatpush1.xpose.msra.mxu0 %v76
    %184 = vmatprep.subr.mxu0 0.0
    %185 = vmatpush1.xpose.msra.mxu0 %v77
    %186 = vmatprep.subr.mxu0 0.0
    %187 = vmatpush1.xpose.msra.mxu0 %v78
    %188 = vmatprep.subr.mxu0 0.0
    %189 = vmatpush1.xpose.msra.mxu0 %v79
    %190 = vmatprep.subr.mxu0 0.0
    %191 = vmatpush1.xpose.msra.mxu0 %v80
    %192 = vmatprep.subr.mxu0 0.0
    %193 = vmatpush1.xpose.msra.mxu0 %v81
    %194 = vmatprep.subr.mxu0 0.0
    %195 = vmatpush1.xpose.msra.mxu0 %v82
    %196 = vmatprep.subr.mxu0 0.0
    %197 = vmatpush1.xpose.msra.mxu0 %v83
    %198 = vmatprep.subr.mxu0 0.0
    %199 = vmatpush1.xpose.msra.mxu0 %v84
    %200 = vmatprep.subr.mxu0 0.0
    %201 = vmatpush1.xpose.msra.mxu0 %v85
    %202 = vmatprep.subr.mxu0 0.0
    %203 = vmatpush1.xpose.msra.mxu0 %v86
    %204 = vmatprep.subr.mxu0 0.0
    %205 = vmatpush1.xpose.msra.mxu0 %v87
    %206 = vmatprep.subr.mxu0 0.0
    %207 = vmatpush1.xpose.msra.mxu0 %v88
    %208 = vmatprep.subr.mxu0 0.0
    %209 = vmatpush1.xpose.msra.mxu0 %v89
    %210 = vmatprep.subr.mxu0 0.0
    %211 = vmatpush1.xpose.msra.mxu0 0.0
    %212 = vmatprep.subr.mxu0 0.0
    %213 = vmatpush1.xpose.msra.mxu0 0.0
    %214 = vmatprep.subr.mxu0 0.0
    %215 = vmatpush1.xpose.msra.mxu0 0.0
    %216 = vmatprep.subr.mxu0 0.0
    %217 = vmatpush1.xpose.msra.mxu0 0.0
    %218 = vmatprep.subr.mxu0 0.0
    %219 = vmatpush1.xpose.msra.mxu0 0.0
    %220 = vmatprep.subr.mxu0 0.0
    %221 = vmatpush1.xpose.msra.mxu0 0.0
    %222 = vmatprep.subr.mxu0 0.0
    %223 = vmatpush1.xpose.msra.mxu0 0.0
    %224 = vmatprep.subr.mxu0 0.0
    %225 = vmatpush1.xpose.msra.mxu0 0.0
    %226 = vmatprep.subr.mxu0 0.0
    %227 = vmatpush1.xpose.msra.mxu0 0.0
    %228 = vmatprep.subr.mxu0 0.0
    %229 = vmatpush1.xpose.msra.mxu0 0.0
    %230 = vmatprep.subr.mxu0 0.0
    %231 = vmatpush1.xpose.msra.mxu0 0.0
    %232 = vmatprep.subr.mxu0 0.0
    %233 = vmatpush1.xpose.msra.mxu0 0.0
    %234 = vmatprep.subr.mxu0 0.0
    %235 = vmatpush1.xpose.msra.mxu0 0.0
    %236 = vmatprep.subr.mxu0 0.0
    %237 = vmatpush1.xpose.msra.mxu0 0.0
    %238 = vmatprep.subr.mxu0 0.0
    %239 = vmatpush1.xpose.msra.mxu0 0.0
    %240 = vmatprep.subr.mxu0 0.0
    %241 = vmatpush1.xpose.msra.mxu0 0.0
    %242 = vmatprep.mubr.f32.mxu0 0.0
    %243 = vmatmul.mubr.f32.gmra.mrb[0].mxu0 %v41
    %v244 = vpop.f32.mrb[0].mxu0
    %v245 = vadd.f32 %v103, %v244
    %v246 = vpop.f32.mrb[0].mxu0
    %247 = vdwg.mxu0
    %248 = vst [vmem:[#allocation7] sm:$0xff] %v174
    %249 = vst [vmem:[#allocation7 + $0x8] sm:$0xff] %v176
    %250 = vst [vmem:[#allocation7 + $0x10] sm:$0xff] %v245
    // Predicated region
    $region22: #{tpu_custom_call.1} parent=1 // pred_check
      _
    $region23: #{tpu_custom_call.1} parent=1 // pred_check_branch
      %252 = sbr.rel (0) target = $region25
    $region24: #{tpu_custom_call.1} parent=1 // pred_region
      %s254 = ssub.s32 384, 384
      %255 = vsyncadd [#allocation4], %s254
      %s257 = sshll.u32 [#allocation7], 4
      %s258 = int_to_ptr.vmem [resolvable:$true] %s257
      %260 = dma.vmem_to_hbm [thread:$0]  %s258, 384, %s3, [#allocation4]
    $region25: #{tpu_custom_call.1} parent=1 // pred_fallthru
      _
    // Predicated region
    $region26: #{tpu_custom_call.1} parent=1 // pred_check
      _
    $region27: #{tpu_custom_call.1} parent=1 // pred_check_branch
      %262 = sbr.rel (0) target = $region29
    $region28: #{tpu_custom_call.1} parent=1 // pred_region
      %263 = dma.done [#allocation4], 384
    $region29: #{tpu_custom_call.1} parent=1 // pred_fallthru
      _
    %264 = vsyncpa [#allocation3], 1
    %265 = vsyncpa [#allocation6], 1
    %266 = vsyncpa [#allocation4], 1

</llo_original>
